<compile_context>
chip_gen: v5e
topology: v5e:2x2
jax: 0.10.0
libtpu: 0.0.40
codegen_flags: <defaults>
</compile_context>

<pallas_src>
import functools

import jax
import jax.numpy as jnp
from jax.experimental import pallas as pl
from jax.experimental.pallas import tpu as pltpu

LANE = 128


def _round_up(x, m):
    return (x + m - 1) // m * m


# --------------------------------------------------------------------------
# Kernel: one GINConv layer = tiled aggregation + fused 2-layer MLP head.
# --------------------------------------------------------------------------
def gin_layer_kernel(a_ref, h_ref, w1_ref, b1_ref, w2_ref, b2_ref,
                     o_ref, acc_ref, *, final_act):
    k = pl.program_id(1)

    @pl.when(k == 0)
    def _():
        acc_ref[...] = jnp.zeros_like(acc_ref)

    # (A + I) @ h : neighborhood sum + self term.  bf16 MXU inputs, f32 acc.
    acc_ref[...] += jnp.dot(a_ref[...], h_ref[...],
                            preferred_element_type=jnp.float32)

    @pl.when(k == pl.num_programs(1) - 1)
    def _():
        z = acc_ref[...]
        # MLP hidden layer: Linear (eval-mode BN folded into W1/b1) -> ReLU.
        z1 = jnp.dot(z, w1_ref[...],
                     preferred_element_type=jnp.float32) + b1_ref[...]
        z1 = jnp.maximum(z1, 0.0)
        # MLP output layer: Linear (BN folded into W2/b2 when final_act).
        z2 = jnp.dot(z1, w2_ref[...],
                     preferred_element_type=jnp.float32) + b2_ref[...]
        if final_act:
            # ApplyNodeFunc wrapper: BN (folded) -> ReLU on the MLP output.
            z2 = jnp.maximum(z2, 0.0)
        o_ref[...] = z2.astype(o_ref.dtype)


def gin_layer(a_bf16, h_bf16, params, final_act, *, tm, tk):
    n_pad = a_bf16.shape[0]
    dp_in = h_bf16.shape[1]
    dp_hidden = params["w1"].shape[1]
    dp_out = params["w2"].shape[1]
    grid = (n_pad // tm, n_pad // tk)

    kernel = functools.partial(gin_layer_kernel, final_act=final_act)
    return pl.pallas_call(
        kernel,
        out_shape=jax.ShapeDtypeStruct((n_pad, dp_out), jnp.float32),
        grid_spec=pltpu.PrefetchScalarGridSpec(
            num_scalar_prefetch=0,
            grid=grid,
            in_specs=[
                # adjacency tile (dst rows, src cols)
                pl.BlockSpec((tm, tk), lambda i, k: (i, k)),
                # node-feature tile for the current src columns
                pl.BlockSpec((tk, dp_in), lambda i, k: (k, 0)),
                # resident MLP weights / biases (constant block index)
                pl.BlockSpec((dp_in, dp_hidden), lambda i, k: (0, 0)),
                pl.BlockSpec((1, dp_hidden), lambda i, k: (0, 0)),
                pl.BlockSpec((dp_hidden, dp_out), lambda i, k: (0, 0)),
                pl.BlockSpec((1, dp_out), lambda i, k: (0, 0)),
            ],
            out_specs=pl.BlockSpec((tm, dp_out), lambda i, k: (i, 0)),
            scratch_shapes=[pltpu.VMEM((tm, dp_in), jnp.float32)],
        ),
        compiler_params=pltpu.CompilerParams(
            dimension_semantics=("parallel", "arbitrary"),
            vmem_limit_bytes=32 * 1024 * 1024,
        ),
    )(a_bf16, h_bf16,
      params["w1"], params["b1"], params["w2"], params["b2"])


# --------------------------------------------------------------------------
# Parameter construction / BN folding / lane padding (host-side glue).
# --------------------------------------------------------------------------
def make_layer_params(key, d_in, d_hidden, d_out):
    """Raw params matching MLP(2, d_in, d_hidden, d_out) + eval-mode BN stats."""
    k1, k2, k3, k4 = jax.random.split(key, 4)
    return {
        "w1": jax.random.normal(k1, (d_in, d_hidden), jnp.float32) * 0.1,
        "b1": jax.random.normal(k2, (d_hidden,), jnp.float32) * 0.01,
        "w2": jax.random.normal(k3, (d_hidden, d_out), jnp.float32) * 0.1,
        "b2": jax.random.normal(k4, (d_out,), jnp.float32) * 0.01,
        # BatchNorm1d eval parameters / running stats (PyTorch defaults).
        "bn1_gamma": jnp.ones((d_hidden,), jnp.float32),
        "bn1_beta": jnp.zeros((d_hidden,), jnp.float32),
        "bn1_mean": jnp.zeros((d_hidden,), jnp.float32),
        "bn1_var": jnp.ones((d_hidden,), jnp.float32),
        "bn2_gamma": jnp.ones((d_out,), jnp.float32),
        "bn2_beta": jnp.zeros((d_out,), jnp.float32),
        "bn2_mean": jnp.zeros((d_out,), jnp.float32),
        "bn2_var": jnp.ones((d_out,), jnp.float32),
    }


def fold_and_pad_params(p, final_act, bn_eps=1e-5):
    """Fold eval-mode BatchNorm into the linears; zero-pad to 128 lanes."""
    d_in, d_hidden = p["w1"].shape
    d_out = p["w2"].shape[1]
    dp_in = _round_up(d_in, LANE)
    dp_hidden = _round_up(d_hidden, LANE)
    dp_out = _round_up(d_out, LANE)

    s1 = p["bn1_gamma"] / jnp.sqrt(p["bn1_var"] + bn_eps)
    t1 = p["bn1_beta"] - p["bn1_mean"] * s1
    w1 = p["w1"] * s1[None, :]
    b1 = p["b1"] * s1 + t1
    if final_act:
        s2 = p["bn2_gamma"] / jnp.sqrt(p["bn2_var"] + bn_eps)
        t2 = p["bn2_beta"] - p["bn2_mean"] * s2
        w2 = p["w2"] * s2[None, :]
        b2 = p["b2"] * s2 + t2
    else:
        w2, b2 = p["w2"], p["b2"]

    def pad2(m, r, c):
        return jnp.zeros((r, c), jnp.float32).at[:m.shape[0], :m.shape[1]].set(m)

    return {
        "w1": pad2(w1, dp_in, dp_hidden),
        "b1": pad2(b1[None, :], 1, dp_hidden),
        "w2": pad2(w2, dp_hidden, dp_out),
        "b2": pad2(b2[None, :], 1, dp_out),
        "d_out": d_out,
    }


# --------------------------------------------------------------------------
# GIN.forward (eval mode).
# --------------------------------------------------------------------------
def gin_forward(x, edge_index, layer_params, final_acts, return_hidden=False):
    n, d_in = x.shape

    # Tile sizes sized against a conservative VMEM budget (valid on v5e/v6e/v7x);
    # pad N so it divides both tiles.
    tm = 256 if n > 256 else LANE
    tk = 512 if n > 512 else LANE
    n_pad = _round_up(n, max(tm, tk))

    # Dense adjacency with self-loop identity folded in: (A + I)[dst, src].
    # Duplicate edges accumulate (aggr='sum'); eps = 0 (train_eps=False).
    # Stored bf16: small integer multiplicities are exactly representable.
    a = jnp.zeros((n_pad, n_pad), jnp.float32)
    a = a.at[edge_index[1], edge_index[0]].add(1.0)
    a = a + jnp.eye(n_pad, dtype=jnp.float32)
    a = a.astype(jnp.bfloat16)

    dp_in = _round_up(d_in, LANE)
    h = jnp.zeros((n_pad, dp_in), jnp.float32).at[:n, :d_in].set(x)

    # Dropout is identity in eval mode; head is nn.Identity.
    hidden_list = []
    for p_raw, fa in zip(layer_params, final_acts):
        p = fold_and_pad_params(p_raw, fa)
        # Padded rows/cols of h stay confined to padded output rows (A's real
        # rows have zeros in padded columns), so no masking is needed.
        h = gin_layer(a, h.astype(jnp.bfloat16), p, fa, tm=tm, tk=tk)
        hidden_list.append(h[:n, :p["d_out"]])

    out = hidden_list[-1]
    if return_hidden:
        return out, hidden_list
    return out


if __name__ == "__main__":
    # Small GIN config: in_dim=8, num_hidden=32, out_dim=16, num_layers=2,
    # encoding=False, learn_eps=False, aggr='sum', eval mode.
    N, E = 16, 48
    in_dim, num_hidden, out_dim, num_layers = 8, 32, 16, 2

    key = jax.random.PRNGKey(0)
    kx, ke_src, ke_dst, kp = jax.random.split(key, 4)

    x = jax.random.normal(kx, (N, in_dim), jnp.float32)
    src = jax.random.randint(ke_src, (E,), 0, N)
    dst = jax.random.randint(ke_dst, (E,), 0, N)
    edge_index = jnp.stack([src, dst], axis=0).astype(jnp.int32)

    # Layer 0: GINConv(ApplyNodeFunc(MLP(2, in_dim, H, H)))  -> trailing BN+ReLU.
    # Layer 1 (last, encoding=False): GINConv(MLP(2, H, H, out_dim)) -> linear.
    pkeys = jax.random.split(kp, num_layers)
    layer_params = [
        make_layer_params(pkeys[0], in_dim, num_hidden, num_hidden),
        make_layer_params(pkeys[1], num_hidden, num_hidden, out_dim),
    ]
    final_acts = [True, False]

    out = gin_forward(x, edge_index, layer_params, final_acts)
    out = jax.block_until_ready(out)
    assert out.shape == (N, out_dim), out.shape
    assert bool(jnp.all(jnp.isfinite(out)))
    print("KERNEL_OK")
</pallas_src>

<mosaic_0001>
module attributes {stable_mosaic.version = 11 : i64} {
  func.func @gin_layer_kernel(%arg0: i32, %arg1: i32, %arg2: memref<128x128xbf16, #tpu.memory_space<vmem>>, %arg3: memref<128x128xbf16, #tpu.memory_space<vmem>>, %arg4: memref<128x128xf32, #tpu.memory_space<vmem>>, %arg5: memref<1x128xf32, #tpu.memory_space<vmem>>, %arg6: memref<128x128xf32, #tpu.memory_space<vmem>>, %arg7: memref<1x128xf32, #tpu.memory_space<vmem>>, %arg8: memref<128x128xf32, #tpu.memory_space<vmem>>, %arg9: memref<128x128xf32, #tpu.memory_space<vmem>>) attributes {dimension_semantics = [#tpu.dimension_semantics<parallel>, #tpu.dimension_semantics<arbitrary>], iteration_bounds = array<i64: 1, 1>, scalar_prefetch = 0 : i64, scratch_operands = 1 : i64, tpu.core_type = #tpu.core_type<tc>, window_params = [{transform_indices = @transform_0, window_bounds = array<i64: 128, 128>}, {transform_indices = @transform_1, window_bounds = array<i64: 128, 128>}, {pipeline_mode = #tpu.pipeline_mode<synchronous>, transform_indices = @transform_2, window_bounds = array<i64: 128, 128>}, {pipeline_mode = #tpu.pipeline_mode<synchronous>, transform_indices = @transform_3, window_bounds = array<i64: 1, 128>}, {pipeline_mode = #tpu.pipeline_mode<synchronous>, transform_indices = @transform_4, window_bounds = array<i64: 128, 128>}, {pipeline_mode = #tpu.pipeline_mode<synchronous>, transform_indices = @transform_5, window_bounds = array<i64: 1, 128>}, {transform_indices = @transform_6, window_bounds = array<i64: 128, 128>}]} {
    %c0_i32 = arith.constant 0 : i32
    %0 = arith.cmpi eq, %arg1, %c0_i32 : i32
    %1 = arith.extui %0 : i1 to i32
    %c0_i32_0 = arith.constant 0 : i32
    %2 = arith.cmpi ne, %1, %c0_i32_0 : i32
    scf.if %2 {
      %cst_10 = arith.constant 0.000000e+00 : f32
      %12 = vector.broadcast %cst_10 : f32 to vector<128x128xf32>
      %c0_11 = arith.constant 0 : index
      %c0_12 = arith.constant 0 : index
      %13 = vector.load %arg9[%c0_11, %c0_12] : memref<128x128xf32, #tpu.memory_space<vmem>>, vector<128x128xf32>
      tpu.vector_store %arg9[%c0_11, %c0_12], %12 {strides = array<i32>} : memref<128x128xf32, #tpu.memory_space<vmem>>, vector<128x128xf32>,
    } else {
    }
    %c0 = arith.constant 0 : index
    %c0_1 = arith.constant 0 : index
    %3 = vector.load %arg9[%c0, %c0_1] : memref<128x128xf32, #tpu.memory_space<vmem>>, vector<128x128xf32>
    %c0_2 = arith.constant 0 : index
    %c0_3 = arith.constant 0 : index
    %4 = vector.load %arg2[%c0_2, %c0_3] : memref<128x128xbf16, #tpu.memory_space<vmem>>, vector<128x128xbf16>
    %c0_4 = arith.constant 0 : index
    %c0_5 = arith.constant 0 : index
    %5 = vector.load %arg3[%c0_4, %c0_5] : memref<128x128xbf16, #tpu.memory_space<vmem>>, vector<128x128xbf16>
    %cst = arith.constant dense<0.000000e+00> : vector<128x128xf32>
    %6 = tpu.matmul %4, %5, %cst {dimension_numbers = #tpu.dot_dimension_numbers<[1], [0], [0], [1], [0, 0, 1, 1], [], []>} : vector<128x128xbf16>, vector<128x128xbf16>, vector<128x128xf32> -> vector<128x128xf32>
    %7 = arith.addf %3, %6 : vector<128x128xf32>
    %c0_6 = arith.constant 0 : index
    %c0_7 = arith.constant 0 : index
    %8 = vector.load %arg9[%c0_6, %c0_7] : memref<128x128xf32, #tpu.memory_space<vmem>>, vector<128x128xf32>
    tpu.vector_store %arg9[%c0_6, %c0_7], %7 {strides = array<i32>} : memref<128x128xf32, #tpu.memory_space<vmem>>, vector<128x128xf32>,
    %c0_i32_8 = arith.constant 0 : i32
    %9 = arith.cmpi eq, %arg1, %c0_i32_8 : i32
    %10 = arith.extui %9 : i1 to i32
    %c0_i32_9 = arith.constant 0 : i32
    %11 = arith.cmpi ne, %10, %c0_i32_9 : i32
    scf.if %11 {
      %c0_10 = arith.constant 0 : index
      %c0_11 = arith.constant 0 : index
      %12 = vector.load %arg9[%c0_10, %c0_11] : memref<128x128xf32, #tpu.memory_space<vmem>>, vector<128x128xf32>
      %c0_12 = arith.constant 0 : index
      %c0_13 = arith.constant 0 : index
      %13 = vector.load %arg4[%c0_12, %c0_13] : memref<128x128xf32, #tpu.memory_space<vmem>>, vector<128x128xf32>
      %cst_14 = arith.constant dense<0.000000e+00> : vector<128x128xf32>
      %14 = tpu.matmul %12, %13, %cst_14 {dimension_numbers = #tpu.dot_dimension_numbers<[1], [0], [0], [1], [0, 0, 1, 1], [], []>} : vector<128x128xf32>, vector<128x128xf32>, vector<128x128xf32> -> vector<128x128xf32>
      %c0_15 = arith.constant 0 : index
      %c0_16 = arith.constant 0 : index
      %15 = vector.load %arg5[%c0_15, %c0_16] : memref<1x128xf32, #tpu.memory_space<vmem>>, vector<1x128xf32>
      %16 = vector.broadcast %15 : vector<1x128xf32> to vector<128x128xf32>
      %17 = arith.addf %14, %16 : vector<128x128xf32>
      %cst_17 = arith.constant 0.000000e+00 : f32
      %18 = vector.broadcast %cst_17 : f32 to vector<128x128xf32>
      %19 = arith.maximumf %17, %18 : vector<128x128xf32>
      %c0_18 = arith.constant 0 : index
      %c0_19 = arith.constant 0 : index
      %20 = vector.load %arg6[%c0_18, %c0_19] : memref<128x128xf32, #tpu.memory_space<vmem>>, vector<128x128xf32>
      %cst_20 = arith.constant dense<0.000000e+00> : vector<128x128xf32>
      %21 = tpu.matmul %19, %20, %cst_20 {dimension_numbers = #tpu.dot_dimension_numbers<[1], [0], [0], [1], [0, 0, 1, 1], [], []>} : vector<128x128xf32>, vector<128x128xf32>, vector<128x128xf32> -> vector<128x128xf32>
      %c0_21 = arith.constant 0 : index
      %c0_22 = arith.constant 0 : index
      %22 = vector.load %arg7[%c0_21, %c0_22] : memref<1x128xf32, #tpu.memory_space<vmem>>, vector<1x128xf32>
      %23 = vector.broadcast %22 : vector<1x128xf32> to vector<128x128xf32>
      %24 = arith.addf %21, %23 : vector<128x128xf32>
      %cst_23 = arith.constant 0.000000e+00 : f32
      %25 = vector.broadcast %cst_23 : f32 to vector<128x128xf32>
      %26 = arith.maximumf %24, %25 : vector<128x128xf32>
      %c0_24 = arith.constant 0 : index
      %c0_25 = arith.constant 0 : index
      %27 = vector.load %arg8[%c0_24, %c0_25] : memref<128x128xf32, #tpu.memory_space<vmem>>, vector<128x128xf32>
      tpu.vector_store %arg8[%c0_24, %c0_25], %26 {strides = array<i32>} : memref<128x128xf32, #tpu.memory_space<vmem>>, vector<128x128xf32>,
    } else {
    }
    return
  }
  func.func @transform_0(%arg0: i32, %arg1: i32) -> (i32, i32) {
    %c0_i32 = arith.constant 0 : i32
    return %arg0, %arg1 : i32, i32
  }
  func.func @transform_1(%arg0: i32, %arg1: i32) -> (i32, i32) {
    %c0_i32 = arith.constant 0 : i32
    %c0_i32_0 = arith.constant 0 : i32
    return %arg1, %c0_i32 : i32, i32
  }
  func.func @transform_2(%arg0: i32, %arg1: i32) -> (i32, i32) {
    %c0_i32 = arith.constant 0 : i32
    %c0_i32_0 = arith.constant 0 : i32
    %c0_i32_1 = arith.constant 0 : i32
    return %c0_i32, %c0_i32_0 : i32, i32
  }
  func.func @transform_3(%arg0: i32, %arg1: i32) -> (i32, i32) {
    %c0_i32 = arith.constant 0 : i32
    %c0_i32_0 = arith.constant 0 : i32
    %c0_i32_1 = arith.constant 0 : i32
    return %c0_i32, %c0_i32_0 : i32, i32
  }
  func.func @transform_4(%arg0: i32, %arg1: i32) -> (i32, i32) {
    %c0_i32 = arith.constant 0 : i32
    %c0_i32_0 = arith.constant 0 : i32
    %c0_i32_1 = arith.constant 0 : i32
    return %c0_i32, %c0_i32_0 : i32, i32
  }
  func.func @transform_5(%arg0: i32, %arg1: i32) -> (i32, i32) {
    %c0_i32 = arith.constant 0 : i32
    %c0_i32_0 = arith.constant 0 : i32
    %c0_i32_1 = arith.constant 0 : i32
    return %c0_i32, %c0_i32_0 : i32, i32
  }
  func.func @transform_6(%arg0: i32, %arg1: i32) -> (i32, i32) {
    %c0_i32 = arith.constant 0 : i32
    %c0_i32_0 = arith.constant 0 : i32
    return %arg0, %c0_i32 : i32, i32
  }
}

</mosaic_0001>

<llo_original>
// kernel: tpu_custom_call.1
$region0: #{tpu_custom_call.1}
  #allocation0 [shape = 'u32[]', space=smem, size = 0x4, offset = 0x4, fixed_abs, tag = 'smem constant byte address 0x4 - core index']
  #allocation1 [shape = 'u32[72,128]{1,0:T(1,128)}', space=vmem, size = 0x9000, scoped, tag = 'internal scratch']
  #allocation2 [shape = 'f32[128,128]{1,0:T(8,128)}', space=vmem, size = 0x10000, scoped, tag = 'scratch operand']
  %s0 = inlined_call_operand.hbm [shape: bf16[128,128], index: 0, kind: input, shape index: {}]
  %s1 = inlined_call_operand.hbm [shape: bf16[128,128], index: 1, kind: input, shape index: {}]
  %s2 = inlined_call_operand.hbm [shape: f32[128,128], index: 2, kind: input, shape index: {}]
  %s3 = inlined_call_operand.vmem [shape: f32[1,128], index: 3, kind: input, shape index: {}]
  %s4 = inlined_call_operand.hbm [shape: f32[128,128], index: 4, kind: input, shape index: {}]
  %s5 = inlined_call_operand.vmem [shape: f32[1,128], index: 5, kind: input, shape index: {}]
  %s6 = inlined_call_operand.hbm [shape: f32[128,128], index: 6, kind: output, shape index: {}]
  %s7 = sld [smem:[#allocation0]]
  $region58: #{tpu_custom_call.1} parent=0
    _
  %s9 = ssub.s32 1, %s7
  %s10 = scalar_select 0, %s9, %s7
  $region1: #{tpu_custom_call.1} parent=0
    #allocation3 [shape = 'u8[32768]{0}', space=vmem, size = 0x8000, scoped, tag = 'input window, operand 0, single buffered']
    #allocation4 [shape = 's32[1]{0}', space=sflag, size = 0x4, scoped, tag = 'scoped memory for tpu_custom_call.1']
    #allocation5 [shape = 's32[1]{0}', space=sflag, size = 0x4, scoped, tag = 'scoped memory for tpu_custom_call.1']
    #allocation6 [shape = 'u8[32768]{0}', space=vmem, size = 0x8000, scoped, tag = 'input window, operand 1, single buffered']
    #allocation7 [shape = 's32[1]{0}', space=sflag, size = 0x4, scoped, tag = 'scoped memory for tpu_custom_call.1']
    #allocation8 [shape = 'u8[65536]{0}', space=vmem, size = 0x10000, scoped, tag = 'input window, operand 2, single buffered']
    #allocation9 [shape = 'u8[65536]{0}', space=vmem, size = 0x10000, scoped, tag = 'input window, operand 4, single buffered']
    #allocation10 [shape = 's32[1]{0}', space=sflag, size = 0x4, scoped, tag = 'scoped memory for tpu_custom_call.1']
    #allocation11 [shape = 'u8[65536]{0}', space=vmem, size = 0x10000, scoped, tag = 'output window, operand 0, single buffered']
    %11 = vsyncpa [#allocation4], 0
    %12 = vsyncpa [#allocation7], 0
    %13 = vsyncpa [#allocation10], 0
    %14 = vsyncpa [#allocation5], 0
    // Predicated region
    $region2: #{tpu_custom_call.1} parent=1 // pred_check
      _
    $region3: #{tpu_custom_call.1} parent=1 // pred_check_branch
      %16 = sbr.rel (0) target = $region5
    $region4: #{tpu_custom_call.1} parent=1 // pred_region
      %18 = vsyncadd [#allocation4], 0
      %s19 = sshll.u32 %s0, 4
      %s20 = int_to_ptr.hbm [resolvable:$true] %s19
      %s21 = sshll.u32 [#allocation3], 4
      %s22 = int_to_ptr.vmem [resolvable:$true] %s21
      %27 = dma.hbm_to_vmem [thread:$0]  %s20, 1024, %s22, [#allocation4], 64, 64, 4
    $region5: #{tpu_custom_call.1} parent=1 // pred_fallthru
      _
    // Predicated region
    $region6: #{tpu_custom_call.1} parent=1 // pred_check
      _
    $region7: #{tpu_custom_call.1} parent=1 // pred_check_branch
      %29 = sbr.rel (0) target = $region9
    $region8: #{tpu_custom_call.1} parent=1 // pred_region
      %31 = vsyncadd [#allocation7], 0
      %s32 = sshll.u32 %s1, 4
      %s33 = int_to_ptr.hbm [resolvable:$true] %s32
      %s34 = sshll.u32 [#allocation6], 4
      %s35 = int_to_ptr.vmem [resolvable:$true] %s34
      %40 = dma.hbm_to_vmem [thread:$0]  %s33, 1024, %s35, [#allocation7], 64, 64, 4
    $region9: #{tpu_custom_call.1} parent=1 // pred_fallthru
      _
    // Predicated region
    $region10: #{tpu_custom_call.1} parent=1 // pred_check
      _
    $region11: #{tpu_custom_call.1} parent=1 // pred_check_branch
      %42 = sbr.rel (0) target = $region13
    $region12: #{tpu_custom_call.1} parent=1 // pred_region
      %44 = vsyncadd [#allocation7], 0
      %s45 = sshll.u32 %s2, 4
      %s46 = int_to_ptr.hbm [resolvable:$true] %s45
      %s47 = sshll.u32 [#allocation8], 4
      %s48 = int_to_ptr.vmem [resolvable:$true] %s47
      %53 = dma.hbm_to_vmem [thread:$0]  %s46, 2048, %s48, [#allocation7], 128, 128, 8
    $region13: #{tpu_custom_call.1} parent=1 // pred_fallthru
      _
    // Predicated region
    $region14: #{tpu_custom_call.1} parent=1 // pred_check
      _
    $region15: #{tpu_custom_call.1} parent=1 // pred_check_branch
      %55 = sbr.rel (0) target = $region17
    $region16: #{tpu_custom_call.1} parent=1 // pred_region
      _
    $region17: #{tpu_custom_call.1} parent=1 // pred_fallthru
      _
    // Predicated region
    $region18: #{tpu_custom_call.1} parent=1 // pred_check
      _
    $region19: #{tpu_custom_call.1} parent=1 // pred_check_branch
      %57 = sbr.rel (0) target = $region21
    $region20: #{tpu_custom_call.1} parent=1 // pred_region
      %59 = vsyncadd [#allocation10], 0
      %s60 = sshll.u32 %s4, 4
      %s61 = int_to_ptr.hbm [resolvable:$true] %s60
      %s62 = sshll.u32 [#allocation9], 4
      %s63 = int_to_ptr.vmem [resolvable:$true] %s62
      %68 = dma.hbm_to_vmem [thread:$0]  %s61, 2048, %s63, [#allocation10], 128, 128, 8
    $region21: #{tpu_custom_call.1} parent=1 // pred_fallthru
      _
    // Predicated region
    $region22: #{tpu_custom_call.1} parent=1 // pred_check
      _
    $region23: #{tpu_custom_call.1} parent=1 // pred_check_branch
      %70 = sbr.rel (0) target = $region25
    $region24: #{tpu_custom_call.1} parent=1 // pred_region
      _
    $region25: #{tpu_custom_call.1} parent=1 // pred_fallthru
      _
    // Predicated region
    $region26: #{tpu_custom_call.1} parent=1 // pred_check
      _
    $region27: #{tpu_custom_call.1} parent=1 // pred_check_branch
      %72 = sbr.rel (0) target = $region29
    $region28: #{tpu_custom_call.1} parent=1 // pred_region
      %74 = dma.done [#allocation4], 1024
    $region29: #{tpu_custom_call.1} parent=1 // pred_fallthru
      _
    // Predicated region
    $region30: #{tpu_custom_call.1} parent=1 // pred_check
      _
    $region31: #{tpu_custom_call.1} parent=1 // pred_check_branch
      %76 = sbr.rel (0) target = $region33
    $region32: #{tpu_custom_call.1} parent=1 // pred_region
      %78 = dma.done [#allocation7], 1024
    $region33: #{tpu_custom_call.1} parent=1 // pred_fallthru
      _
    // Predicated region
    $region34: #{tpu_custom_call.1} parent=1 // pred_check
      _
    $region35: #{tpu_custom_call.1} parent=1 // pred_check_branch
      %80 = sbr.rel (0) target = $region37
    $region36: #{tpu_custom_call.1} parent=1 // pred_region
      %82 = dma.done [#allocation7], 2048
    $region37: #{tpu_custom_call.1} parent=1 // pred_fallthru
      _
    // Predicated region
    $region38: #{tpu_custom_call.1} parent=1 // pred_check
      _
    $region39: #{tpu_custom_call.1} parent=1 // pred_check_branch
      %84 = sbr.rel (0) target = $region41
    $region40: #{tpu_custom_call.1} parent=1 // pred_region
      %86 = dma.done [#allocation10], 2048
    $region41: #{tpu_custom_call.1} parent=1 // pred_fallthru
      _
    %p87 = scmp.eq.s32.totalorder 0, 0
    // Predicated region
    $region42: #{tpu_custom_call.1} parent=1 // pred_check
      %p88 = pneg %p87
    $region43: #{tpu_custom_call.1} parent=1 // pred_check_branch
      %90 = sbr.rel (%p88) target = $region45
    $region44: #{tpu_custom_call.1} parent=1 // pred_region
      %91 = vst [vmem:[#allocation2] sm:$0xff] 0.0
      %92 = vst [vmem:[#allocation2 + $0x8] sm:$0xff] 0.0
      %93 = vst [vmem:[#allocation2 + $0x10] sm:$0xff] 0.0
      %94 = vst [vmem:[#allocation2 + $0x18] sm:$0xff] 0.0
      %95 = vst [vmem:[#allocation2 + $0x20] sm:$0xff] 0.0
      %96 = vst [vmem:[#allocation2 + $0x28] sm:$0xff] 0.0
      %97 = vst [vmem:[#allocation2 + $0x30] sm:$0xff] 0.0
      %98 = vst [vmem:[#allocation2 + $0x38] sm:$0xff] 0.0
      %99 = vst [vmem:[#allocation2 + $0x40] sm:$0xff] 0.0
      %100 = vst [vmem:[#allocation2 + $0x48] sm:$0xff] 0.0
      %101 = vst [vmem:[#allocation2 + $0x50] sm:$0xff] 0.0
      %102 = vst [vmem:[#allocation2 + $0x58] sm:$0xff] 0.0
      %103 = vst [vmem:[#allocation2 + $0x60] sm:$0xff] 0.0
      %104 = vst [vmem:[#allocation2 + $0x68] sm:$0xff] 0.0
      %105 = vst [vmem:[#allocation2 + $0x70] sm:$0xff] 0.0
      %106 = vst [vmem:[#allocation2 + $0x78] sm:$0xff] 0.0
    $region45: #{tpu_custom_call.1} parent=1 // pred_fallthru
      _
    %v107 = vld [vmem:[#allocation2] sm:$0xff]
    %v108 = vld [vmem:[#allocation2 + $0x8] sm:$0xff]
    %v109 = vld [vmem:[#allocation2 + $0x10] sm:$0xff]
    %v110 = vld [vmem:[#allocation2 + $0x18] sm:$0xff]
    %v111 = vld [vmem:[#allocation2 + $0x20] sm:$0xff]
    %v112 = vld [vmem:[#allocation2 + $0x28] sm:$0xff]
    %v113 = vld [vmem:[#allocation2 + $0x30] sm:$0xff]
    %v114 = vld [vmem:[#allocation2 + $0x38] sm:$0xff]
    %v115 = vld [vmem:[#allocation2 + $0x40] sm:$0xff]
    %v116 = vld [vmem:[#allocation2 + $0x48] sm:$0xff]
    %v117 = vld [vmem:[#allocation2 + $0x50] sm:$0xff]
    %v118 = vld [vmem:[#allocation2 + $0x58] sm:$0xff]
    %v119 = vld [vmem:[#allocation2 + $0x60] sm:$0xff]
    %v120 = vld [vmem:[#allocation2 + $0x68] sm:$0xff]
    %v121 = vld [vmem:[#allocation2 + $0x70] sm:$0xff]
    %v122 = vld [vmem:[#allocation2 + $0x78] sm:$0xff]
    %v123 = vld [vmem:[#allocation3] sm:$0xf]
    %v124 = vld [vmem:[#allocation3 + $0x4] sm:$0xf]
    %v125 = vld [vmem:[#allocation3 + $0x8] sm:$0xf]
    %v126 = vld [vmem:[#allocation3 + $0xc] sm:$0xf]
    %v127 = vld [vmem:[#allocation3 + $0x10] sm:$0xf]
    %v128 = vld [vmem:[#allocation3 + $0x14] sm:$0xf]
    %v129 = vld [vmem:[#allocation3 + $0x18] sm:$0xf]
    %v130 = vld [vmem:[#allocation3 + $0x1c] sm:$0xf]
    %v131 = vld [vmem:[#allocation3 + $0x20] sm:$0xf]
    %v132 = vld [vmem:[#allocation3 + $0x24] sm:$0xf]
    %v133 = vld [vmem:[#allocation3 + $0x28] sm:$0xf]
    %v134 = vld [vmem:[#allocation3 + $0x2c] sm:$0xf]
    %v135 = vld [vmem:[#allocation3 + $0x30] sm:$0xf]
    %v136 = vld [vmem:[#allocation3 + $0x34] sm:$0xf]
    %v137 = vld [vmem:[#allocation3 + $0x38] sm:$0xf]
    %v138 = vld [vmem:[#allocation3 + $0x3c] sm:$0xf]
    %v139 = vld [vmem:[#allocation6] sm:$0xf]
    %v140 = vld [vmem:[#allocation6 + $0x4] sm:$0xf]
    %v141 = vld [vmem:[#allocation6 + $0x8] sm:$0xf]
    %v142 = vld [vmem:[#allocation6 + $0xc] sm:$0xf]
    %v143 = vld [vmem:[#allocation6 + $0x10] sm:$0xf]
    %v144 = vld [vmem:[#allocation6 + $0x14] sm:$0xf]
    %v145 = vld [vmem:[#allocation6 + $0x18] sm:$0xf]
    %v146 = vld [vmem:[#allocation6 + $0x1c] sm:$0xf]
    %v147 = vld [vmem:[#allocation6 + $0x20] sm:$0xf]
    %v148 = vld [vmem:[#allocation6 + $0x24] sm:$0xf]
    %v149 = vld [vmem:[#allocation6 + $0x28] sm:$0xf]
    %v150 = vld [vmem:[#allocation6 + $0x2c] sm:$0xf]
    %v151 = vld [vmem:[#allocation6 + $0x30] sm:$0xf]
    %v152 = vld [vmem:[#allocation6 + $0x34] sm:$0xf]
    %v153 = vld [vmem:[#allocation6 + $0x38] sm:$0xf]
    %v154 = vld [vmem:[#allocation6 + $0x3c] sm:$0xf]
    %v171 = vunpack.c.l.b16 %v123
    %v172 = vunpack.c.l.b16 %v124
    %v173 = vunpack.c.l.b16 %v125
    %v174 = vunpack.c.l.b16 %v126
    %v175 = vunpack.c.l.b16 %v127
    %v176 = vunpack.c.l.b16 %v128
    %v177 = vunpack.c.l.b16 %v129
    %v178 = vunpack.c.l.b16 %v130
    %v179 = vunpack.c.l.b16 %v131
    %v180 = vunpack.c.l.b16 %v132
    %v181 = vunpack.c.l.b16 %v133
    %v182 = vunpack.c.l.b16 %v134
    %v183 = vunpack.c.l.b16 %v135
    %v184 = vunpack.c.l.b16 %v136
    %v185 = vunpack.c.l.b16 %v137
    %v186 = vunpack.c.l.b16 %v138
    %v187 = vpack.c.b16 %v172, %v171
    %v188 = vpack.c.b16 %v174, %v173
    %v189 = vpack.c.b16 %v176, %v175
    %v190 = vpack.c.b16 %v178, %v177
    %v191 = vpack.c.b16 %v180, %v179
    %v192 = vpack.c.b16 %v182, %v181
    %v193 = vpack.c.b16 %v184, %v183
    %v194 = vpack.c.b16 %v186, %v185
    %v219 = vunpack.c.l.b16 %v139
    %v220 = vunpack.c.l.b16 %v140
    %v221 = vunpack.c.l.b16 %v141
    %v222 = vunpack.c.l.b16 %v142
    %v223 = vunpack.c.l.b16 %v143
    %v224 = vunpack.c.l.b16 %v144
    %v225 = vunpack.c.l.b16 %v145
    %v226 = vunpack.c.l.b16 %v146
    %v227 = vunpack.c.l.b16 %v147
    %v228 = vunpack.c.l.b16 %v148
    %v229 = vunpack.c.l.b16 %v149
    %v230 = vunpack.c.l.b16 %v150
    %v231 = vunpack.c.l.b16 %v151
    %v232 = vunpack.c.l.b16 %v152
    %v233 = vunpack.c.l.b16 %v153
    %v234 = vunpack.c.l.b16 %v154
    %v235 = vpack.c.b16 %v220, %v219
    %v236 = vpack.c.b16 %v222, %v221
    %v237 = vpack.c.b16 %v224, %v223
    %v238 = vpack.c.b16 %v226, %v225
    %v239 = vpack.c.b16 %v228, %v227
    %v240 = vpack.c.b16 %v230, %v229
    %v241 = vpack.c.b16 %v232, %v231
    %v242 = vpack.c.b16 %v234, %v233
    %251 = vmatpush.bf16.msra.mxu0 %v242
    %252 = vmatpush.bf16.msra.mxu0 %v241
    %253 = vmatpush.bf16.msra.mxu0 %v240
    %254 = vmatpush.bf16.msra.mxu0 %v239
    %255 = vmatpush.bf16.msra.mxu0 %v238
    %256 = vmatpush.bf16.msra.mxu0 %v237
    %257 = vmatpush.bf16.msra.mxu0 %v236
    %258 = vmatpush.bf16.msra.mxu0 %v235
    %259 = vmatmul.bf16.gmra.mxu0 %v187
    %v260 = vpop.f32.mrf.mxu0
    %v261 = vadd.f32 0.0, %v260
    %v262 = vpop.f32.mrf.mxu0
    %v263 = vadd.f32 0.0, %v262
    %264 = vmatmul.bf16.gmra.mxu0 %v188
    %v265 = vpop.f32.mrf.mxu0
    %v266 = vadd.f32 0.0, %v265
    %v267 = vpop.f32.mrf.mxu0
    %v268 = vadd.f32 0.0, %v267
    %269 = vmatmul.bf16.gmra.mxu0 %v189
    %v270 = vpop.f32.mrf.mxu0
    %v271 = vadd.f32 0.0, %v270
    %v272 = vpop.f32.mrf.mxu0
    %v273 = vadd.f32 0.0, %v272
    %274 = vmatmul.bf16.gmra.mxu0 %v190
    %v275 = vpop.f32.mrf.mxu0
    %v276 = vadd.f32 0.0, %v275
    %v277 = vpop.f32.mrf.mxu0
    %v278 = vadd.f32 0.0, %v277
    %279 = vmatmul.bf16.gmra.mxu0 %v191
    %v280 = vpop.f32.mrf.mxu0
    %v281 = vadd.f32 0.0, %v280
    %v282 = vpop.f32.mrf.mxu0
    %v283 = vadd.f32 0.0, %v282
    %284 = vmatmul.bf16.gmra.mxu0 %v192
    %v285 = vpop.f32.mrf.mxu0
    %v286 = vadd.f32 0.0, %v285
    %v287 = vpop.f32.mrf.mxu0
    %v288 = vadd.f32 0.0, %v287
    %289 = vmatmul.bf16.gmra.mxu0 %v193
    %v290 = vpop.f32.mrf.mxu0
    %v291 = vadd.f32 0.0, %v290
    %v292 = vpop.f32.mrf.mxu0
    %v293 = vadd.f32 0.0, %v292
    %294 = vmatmul.bf16.gmra.mxu0 %v194
    %v295 = vpop.f32.mrf.mxu0
    %v296 = vadd.f32 0.0, %v295
    %v297 = vpop.f32.mrf.mxu0
    %v298 = vadd.f32 0.0, %v297
    %299 = vdwg.mxu0
    %v300 = vadd.f32 %v107, %v261
    %v301 = vadd.f32 %v108, %v263
    %v302 = vadd.f32 %v109, %v266
    %v303 = vadd.f32 %v110, %v268
    %v304 = vadd.f32 %v111, %v271
    %v305 = vadd.f32 %v112, %v273
    %v306 = vadd.f32 %v113, %v276
    %v307 = vadd.f32 %v114, %v278
    %v308 = vadd.f32 %v115, %v281
    %v309 = vadd.f32 %v116, %v283
    %v310 = vadd.f32 %v117, %v286
    %v311 = vadd.f32 %v118, %v288
    %v312 = vadd.f32 %v119, %v291
    %v313 = vadd.f32 %v120, %v293
    %v314 = vadd.f32 %v121, %v296
    %v315 = vadd.f32 %v122, %v298
    %316 = vst [vmem:[#allocation2] sm:$0xff] %v300
    %317 = vst [vmem:[#allocation2 + $0x8] sm:$0xff] %v301
    %318 = vst [vmem:[#allocation2 + $0x10] sm:$0xff] %v302
    %319 = vst [vmem:[#allocation2 + $0x18] sm:$0xff] %v303
    %320 = vst [vmem:[#allocation2 + $0x20] sm:$0xff] %v304
    %321 = vst [vmem:[#allocation2 + $0x28] sm:$0xff] %v305
    %322 = vst [vmem:[#allocation2 + $0x30] sm:$0xff] %v306
    %323 = vst [vmem:[#allocation2 + $0x38] sm:$0xff] %v307
    %324 = vst [vmem:[#allocation2 + $0x40] sm:$0xff] %v308
    %325 = vst [vmem:[#allocation2 + $0x48] sm:$0xff] %v309
    %326 = vst [vmem:[#allocation2 + $0x50] sm:$0xff] %v310
    %327 = vst [vmem:[#allocation2 + $0x58] sm:$0xff] %v311
    %328 = vst [vmem:[#allocation2 + $0x60] sm:$0xff] %v312
    %329 = vst [vmem:[#allocation2 + $0x68] sm:$0xff] %v313
    %330 = vst [vmem:[#allocation2 + $0x70] sm:$0xff] %v314
    %331 = vst [vmem:[#allocation2 + $0x78] sm:$0xff] %v315
    // Predicated region
    $region46: #{tpu_custom_call.1} parent=1 // pred_check
      %p332 = pneg %p87
    $region47: #{tpu_custom_call.1} parent=1 // pred_check_branch
      %334 = sbr.rel (%p332) target = $region49
    $region48: #{tpu_custom_call.1} parent=1 // pred_region
      %v335 = vld [vmem:[#allocation2] sm:$0xff]
      %v336 = vld [vmem:[#allocation2 + $0x8] sm:$0xff]
      %v337 = vld [vmem:[#allocation2 + $0x10] sm:$0xff]
      %v338 = vld [vmem:[#allocation2 + $0x18] sm:$0xff]
      %v339 = vld [vmem:[#allocation2 + $0x20] sm:$0xff]
      %v340 = vld [vmem:[#allocation2 + $0x28] sm:$0xff]
      %v341 = vld [vmem:[#allocation2 + $0x30] sm:$0xff]
      %v342 = vld [vmem:[#allocation2 + $0x38] sm:$0xff]
      %v343 = vld [vmem:[#allocation2 + $0x40] sm:$0xff]
      %v344 = vld [vmem:[#allocation2 + $0x48] sm:$0xff]
      %v345 = vld [vmem:[#allocation2 + $0x50] sm:$0xff]
      %v346 = vld [vmem:[#allocation2 + $0x58] sm:$0xff]
      %v347 = vld [vmem:[#allocation2 + $0x60] sm:$0xff]
      %v348 = vld [vmem:[#allocation2 + $0x68] sm:$0xff]
      %v349 = vld [vmem:[#allocation2 + $0x70] sm:$0xff]
      %v350 = vld [vmem:[#allocation2 + $0x78] sm:$0xff]
      %v351 = vld [vmem:[#allocation8] sm:$0xff]
      %v352 = vld [vmem:[#allocation8 + $0x8] sm:$0xff]
      %v353 = vld [vmem:[#allocation8 + $0x10] sm:$0xff]
      %v354 = vld [vmem:[#allocation8 + $0x18] sm:$0xff]
      %v355 = vld [vmem:[#allocation8 + $0x20] sm:$0xff]
      %v356 = vld [vmem:[#allocation8 + $0x28] sm:$0xff]
      %v357 = vld [vmem:[#allocation8 + $0x30] sm:$0xff]
      %v358 = vld [vmem:[#allocation8 + $0x38] sm:$0xff]
      %v359 = vld [vmem:[#allocation8 + $0x40] sm:$0xff]
      %v360 = vld [vmem:[#allocation8 + $0x48] sm:$0xff]
      %v361 = vld [vmem:[#allocation8 + $0x50] sm:$0xff]
      %v362 = vld [vmem:[#allocation8 + $0x58] sm:$0xff]
      %v363 = vld [vmem:[#allocation8 + $0x60] sm:$0xff]
      %v364 = vld [vmem:[#allocation8 + $0x68] sm:$0xff]
      %v365 = vld [vmem:[#allocation8 + $0x70] sm:$0xff]
      %v366 = vld [vmem:[#allocation8 + $0x78] sm:$0xff]
      %v367 = vld [vmem:[%s3] sm:$0x1]
      %v369 = vperm.slane %v367, 0
      %371 = vmatpush.msra.mxu0 %v366
      %372 = vmatpush.msra.mxu0 %v365
      %373 = vmatpush.msra.mxu0 %v364
      %374 = vmatpush.msra.mxu0 %v363
      %375 = vmatpush.msra.mxu0 %v362
      %376 = vmatpush.msra.mxu0 %v361
      %377 = vmatpush.msra.mxu0 %v360
      %378 = vmatpush.msra.mxu0 %v359
      %379 = vmatpush.msra.mxu0 %v358
      %380 = vmatpush.msra.mxu0 %v357
      %381 = vmatpush.msra.mxu0 %v356
      %382 = vmatpush.msra.mxu0 %v355
      %383 = vmatpush.msra.mxu0 %v354
      %384 = vmatpush.msra.mxu0 %v353
      %385 = vmatpush.msra.mxu0 %v352
      %386 = vmatpush.msra.mxu0 %v351
      %387 = vmatmul.f32.gmra.mxu0 %v335
      %v388 = vpop.f32.mrf.mxu0
      %v389 = vadd.f32 %v369, %v388
      %390 = vmatmul.f32.gmra.mxu0 %v336
      %v391 = vpop.f32.mrf.mxu0
      %v392 = vadd.f32 %v369, %v391
      %393 = vmatmul.f32.gmra.mxu0 %v337
      %v394 = vpop.f32.mrf.mxu0
      %v395 = vadd.f32 %v369, %v394
      %396 = vmatmul.f32.gmra.mxu0 %v338
      %v397 = vpop.f32.mrf.mxu0
      %v398 = vadd.f32 %v369, %v397
      %399 = vmatmul.f32.gmra.mxu0 %v339
      %v400 = vpop.f32.mrf.mxu0
      %v401 = vadd.f32 %v369, %v400
      %402 = vmatmul.f32.gmra.mxu0 %v340
      %v403 = vpop.f32.mrf.mxu0
      %v404 = vadd.f32 %v369, %v403
      %405 = vmatmul.f32.gmra.mxu0 %v341
      %v406 = vpop.f32.mrf.mxu0
      %v407 = vadd.f32 %v369, %v406
      %408 = vmatmul.f32.gmra.mxu0 %v342
      %v409 = vpop.f32.mrf.mxu0
      %v410 = vadd.f32 %v369, %v409
      %411 = vmatmul.f32.gmra.mxu0 %v343
      %v412 = vpop.f32.mrf.mxu0
      %v413 = vadd.f32 %v369, %v412
      %414 = vmatmul.f32.gmra.mxu0 %v344
      %v415 = vpop.f32.mrf.mxu0
      %v416 = vadd.f32 %v369, %v415
      %417 = vmatmul.f32.gmra.mxu0 %v345
      %v418 = vpop.f32.mrf.mxu0
      %v419 = vadd.f32 %v369, %v418
      %420 = vmatmul.f32.gmra.mxu0 %v346
      %v421 = vpop.f32.mrf.mxu0
      %v422 = vadd.f32 %v369, %v421
      %423 = vmatmul.f32.gmra.mxu0 %v347
      %v424 = vpop.f32.mrf.mxu0
      %v425 = vadd.f32 %v369, %v424
      %426 = vmatmul.f32.gmra.mxu0 %v348
      %v427 = vpop.f32.mrf.mxu0
      %v428 = vadd.f32 %v369, %v427
      %429 = vmatmul.f32.gmra.mxu0 %v349
      %v430 = vpop.f32.mrf.mxu0
      %v431 = vadd.f32 %v369, %v430
      %432 = vmatmul.f32.gmra.mxu0 %v350
      %v433 = vpop.f32.mrf.mxu0
      %v434 = vadd.f32 %v369, %v433
      %435 = vdwg.mxu0
      %v436 = vmax.f32 %v389, 0.0
      %v437 = vmax.f32 %v392, 0.0
      %v438 = vmax.f32 %v395, 0.0
      %v439 = vmax.f32 %v398, 0.0
      %v440 = vmax.f32 %v401, 0.0
      %v441 = vmax.f32 %v404, 0.0
      %v442 = vmax.f32 %v407, 0.0
      %v443 = vmax.f32 %v410, 0.0
      %v444 = vmax.f32 %v413, 0.0
      %v445 = vmax.f32 %v416, 0.0
      %v446 = vmax.f32 %v419, 0.0
      %v447 = vmax.f32 %v422, 0.0
      %v448 = vmax.f32 %v425, 0.0
      %v449 = vmax.f32 %v428, 0.0
      %v450 = vmax.f32 %v431, 0.0
      %v451 = vmax.f32 %v434, 0.0
      %v452 = vld [vmem:[#allocation9] sm:$0xff]
      %v453 = vld [vmem:[#allocation9 + $0x8] sm:$0xff]
      %v454 = vld [vmem:[#allocation9 + $0x10] sm:$0xff]
      %v455 = vld [vmem:[#allocation9 + $0x18] sm:$0xff]
      %v456 = vld [vmem:[#allocation9 + $0x20] sm:$0xff]
      %v457 = vld [vmem:[#allocation9 + $0x28] sm:$0xff]
      %v458 = vld [vmem:[#allocation9 + $0x30] sm:$0xff]
      %v459 = vld [vmem:[#allocation9 + $0x38] sm:$0xff]
      %v460 = vld [vmem:[#allocation9 + $0x40] sm:$0xff]
      %v461 = vld [vmem:[#allocation9 + $0x48] sm:$0xff]
      %v462 = vld [vmem:[#allocation9 + $0x50] sm:$0xff]
      %v463 = vld [vmem:[#allocation9 + $0x58] sm:$0xff]
      %v464 = vld [vmem:[#allocation9 + $0x60] sm:$0xff]
      %v465 = vld [vmem:[#allocation9 + $0x68] sm:$0xff]
      %v466 = vld [vmem:[#allocation9 + $0x70] sm:$0xff]
      %v467 = vld [vmem:[#allocation9 + $0x78] sm:$0xff]
      %v468 = vld [vmem:[%s5] sm:$0x1]
      %v470 = vperm.slane %v468, 0
      %472 = vmatpush.msra.mxu0 %v467
      %473 = vmatpush.msra.mxu0 %v466
      %474 = vmatpush.msra.mxu0 %v465
      %475 = vmatpush.msra.mxu0 %v464
      %476 = vmatpush.msra.mxu0 %v463
      %477 = vmatpush.msra.mxu0 %v462
      %478 = vmatpush.msra.mxu0 %v461
      %479 = vmatpush.msra.mxu0 %v460
      %480 = vmatpush.msra.mxu0 %v459
      %481 = vmatpush.msra.mxu0 %v458
      %482 = vmatpush.msra.mxu0 %v457
      %483 = vmatpush.msra.mxu0 %v456
      %484 = vmatpush.msra.mxu0 %v455
      %485 = vmatpush.msra.mxu0 %v454
      %486 = vmatpush.msra.mxu0 %v453
      %487 = vmatpush.msra.mxu0 %v452
      %488 = vmatmul.f32.gmra.mxu0 %v436
      %v489 = vpop.f32.mrf.mxu0
      %v490 = vadd.f32 %v470, %v489
      %491 = vmatmul.f32.gmra.mxu0 %v437
      %v492 = vpop.f32.mrf.mxu0
      %v493 = vadd.f32 %v470, %v492
      %494 = vmatmul.f32.gmra.mxu0 %v438
      %v495 = vpop.f32.mrf.mxu0
      %v496 = vadd.f32 %v470, %v495
      %497 = vmatmul.f32.gmra.mxu0 %v439
      %v498 = vpop.f32.mrf.mxu0
      %v499 = vadd.f32 %v470, %v498
      %500 = vmatmul.f32.gmra.mxu0 %v440
      %v501 = vpop.f32.mrf.mxu0
      %v502 = vadd.f32 %v470, %v501
      %503 = vmatmul.f32.gmra.mxu0 %v441
      %v504 = vpop.f32.mrf.mxu0
      %v505 = vadd.f32 %v470, %v504
      %506 = vmatmul.f32.gmra.mxu0 %v442
      %v507 = vpop.f32.mrf.mxu0
      %v508 = vadd.f32 %v470, %v507
      %509 = vmatmul.f32.gmra.mxu0 %v443
      %v510 = vpop.f32.mrf.mxu0
      %v511 = vadd.f32 %v470, %v510
      %512 = vmatmul.f32.gmra.mxu0 %v444
      %v513 = vpop.f32.mrf.mxu0
      %v514 = vadd.f32 %v470, %v513
      %515 = vmatmul.f32.gmra.mxu0 %v445
      %v516 = vpop.f32.mrf.mxu0
      %v517 = vadd.f32 %v470, %v516
      %518 = vmatmul.f32.gmra.mxu0 %v446
      %v519 = vpop.f32.mrf.mxu0
      %v520 = vadd.f32 %v470, %v519
      %521 = vmatmul.f32.gmra.mxu0 %v447
      %v522 = vpop.f32.mrf.mxu0
      %v523 = vadd.f32 %v470, %v522
      %524 = vmatmul.f32.gmra.mxu0 %v448
      %v525 = vpop.f32.mrf.mxu0
      %v526 = vadd.f32 %v470, %v525
      %527 = vmatmul.f32.gmra.mxu0 %v449
      %v528 = vpop.f32.mrf.mxu0
      %v529 = vadd.f32 %v470, %v528
      %530 = vmatmul.f32.gmra.mxu0 %v450
      %v531 = vpop.f32.mrf.mxu0
      %v532 = vadd.f32 %v470, %v531
      %533 = vmatmul.f32.gmra.mxu0 %v451
      %v534 = vpop.f32.mrf.mxu0
      %v535 = vadd.f32 %v470, %v534
      %536 = vdwg.mxu0
      %v537 = vmax.f32 %v490, 0.0
      %v538 = vmax.f32 %v493, 0.0
      %v539 = vmax.f32 %v496, 0.0
      %v540 = vmax.f32 %v499, 0.0
      %v541 = vmax.f32 %v502, 0.0
      %v542 = vmax.f32 %v505, 0.0
      %v543 = vmax.f32 %v508, 0.0
      %v544 = vmax.f32 %v511, 0.0
      %v545 = vmax.f32 %v514, 0.0
      %v546 = vmax.f32 %v517, 0.0
      %v547 = vmax.f32 %v520, 0.0
      %v548 = vmax.f32 %v523, 0.0
      %v549 = vmax.f32 %v526, 0.0
      %v550 = vmax.f32 %v529, 0.0
      %v551 = vmax.f32 %v532, 0.0
      %v552 = vmax.f32 %v535, 0.0
      %553 = vst [vmem:[#allocation11] sm:$0xff] %v537
      %554 = vst [vmem:[#allocation11 + $0x8] sm:$0xff] %v538
      %555 = vst [vmem:[#allocation11 + $0x10] sm:$0xff] %v539
      %556 = vst [vmem:[#allocation11 + $0x18] sm:$0xff] %v540
      %557 = vst [vmem:[#allocation11 + $0x20] sm:$0xff] %v541
      %558 = vst [vmem:[#allocation11 + $0x28] sm:$0xff] %v542
      %559 = vst [vmem:[#allocation11 + $0x30] sm:$0xff] %v543
      %560 = vst [vmem:[#allocation11 + $0x38] sm:$0xff] %v544
      %561 = vst [vmem:[#allocation11 + $0x40] sm:$0xff] %v545
      %562 = vst [vmem:[#allocation11 + $0x48] sm:$0xff] %v546
      %563 = vst [vmem:[#allocation11 + $0x50] sm:$0xff] %v547
      %564 = vst [vmem:[#allocation11 + $0x58] sm:$0xff] %v548
      %565 = vst [vmem:[#allocation11 + $0x60] sm:$0xff] %v549
      %566 = vst [vmem:[#allocation11 + $0x68] sm:$0xff] %v550
      %567 = vst [vmem:[#allocation11 + $0x70] sm:$0xff] %v551
      %568 = vst [vmem:[#allocation11 + $0x78] sm:$0xff] %v552
    $region49: #{tpu_custom_call.1} parent=1 // pred_fallthru
      _
    // Predicated region
    $region50: #{tpu_custom_call.1} parent=1 // pred_check
      _
    $region51: #{tpu_custom_call.1} parent=1 // pred_check_branch
      %570 = sbr.rel (0) target = $region53
    $region52: #{tpu_custom_call.1} parent=1 // pred_region
      %572 = vsyncadd [#allocation5], 0
      %s573 = sshll.u32 [#allocation11], 4
      %s574 = int_to_ptr.vmem [resolvable:$true] %s573
      %s575 = sshll.u32 %s6, 4
      %s576 = int_to_ptr.hbm [resolvable:$true] %s575
      %581 = dma.vmem_to_hbm [thread:$0]  %s574, 2048, %s576, [#allocation5], 128, 128, 8
    $region53: #{tpu_custom_call.1} parent=1 // pred_fallthru
      _
    // Predicated region
    $region54: #{tpu_custom_call.1} parent=1 // pred_check
      _
    $region55: #{tpu_custom_call.1} parent=1 // pred_check_branch
      %583 = sbr.rel (0) target = $region57
    $region56: #{tpu_custom_call.1} parent=1 // pred_region
      %585 = dma.done [#allocation5], 2048
    $region57: #{tpu_custom_call.1} parent=1 // pred_fallthru
      _
    %586 = vsyncpa [#allocation4], 1
    %587 = vsyncpa [#allocation7], 1
    %588 = vsyncpa [#allocation10], 1
    %589 = vsyncpa [#allocation5], 1

</llo_original>
